<compile_context>
chip_gen: v7x
topology: tpu7x:2x2x1
jax: 0.10.0
libtpu: 0.0.40
codegen_flags: <defaults>
</compile_context>

<pallas_src>
import jax
import jax.numpy as jnp
from jax import lax
from jax.experimental import pallas as pl
from jax.experimental.pallas import tpu as pltpu


def _actor_kernel(x_ref, noise_ref, w1_ref, b1_ref, w2_ref, b2_ref,
                  w3_ref, b3_ref, w4_ref, b4_ref, lo_ref, hi_ref, o_ref):
    tb, batch, state_dim = x_ref.shape          # (t_block, B, state_dim)
    x = x_ref[...]                              # f32

    # Per-call normalization: x = (x - x.mean()) / x.std()   (torch std: ddof=1)
    def _sum_bs(v):                             # reduce (B, S) per call index
        return jnp.sum(jnp.sum(v, axis=2, keepdims=True), axis=1, keepdims=True)

    n = batch * state_dim
    mean = _sum_bs(x) * (1.0 / n)               # (tb, 1, 1)
    centered = x - mean
    var = _sum_bs(centered * centered) * (1.0 / (n - 1))
    # NOTE: no epsilon, faithful to the torch module (degenerate batch -> inf/nan)
    xn = centered * lax.rsqrt(var)

    # Fold the T calls into the matmul M dimension: (t_block*B, state_dim).
    h = xn.reshape(tb * batch, state_dim)
    h = jnp.maximum(
        jnp.dot(h, w1_ref[...], preferred_element_type=jnp.float32) + b1_ref[...], 0.0)
    h = jnp.maximum(
        jnp.dot(h, w2_ref[...], preferred_element_type=jnp.float32) + b2_ref[...], 0.0)
    h = jnp.maximum(
        jnp.dot(h, w3_ref[...], preferred_element_type=jnp.float32) + b3_ref[...], 0.0)
    a = jax.nn.sigmoid(
        jnp.dot(h, w4_ref[...], preferred_element_type=jnp.float32) + b4_ref[...])

    # Back to (t_block, B, A) for the elementwise tail: noise, rescale, clamp.
    a = a.reshape(tb, batch, -1) + noise_ref[...]
    lo = lo_ref[...]                            # (1, A) broadcasts over (tb, B, A)
    hi = hi_ref[...]
    a = lo + a * (hi - lo)
    a = jnp.minimum(jnp.maximum(a, lo), hi)
    o_ref[...] = a.astype(o_ref.dtype)


def actor_forward_batched(xs, noise, params, lower, upper, *, t_block=None):
    """xs: [T, B, state_dim] f32 -- T independent forward() calls, each with its
    own per-call normalization.  noise: [T, B, action_dim] f32 (the
    torch.normal exploration noise, drawn deterministically outside the
    kernel).  Returns [T, B, action_dim] f32."""
    T, B, S = xs.shape
    A = noise.shape[-1]
    if t_block is None:
        t_block = T                              # single fused grid step
    assert T % t_block == 0
    grid = (T // t_block,)

    w1, w2, w3, w4 = params["w1"], params["w2"], params["w3"], params["w4"]
    b1 = params["b1"].reshape(1, -1)
    b2 = params["b2"].reshape(1, -1)
    b3 = params["b3"].reshape(1, -1)
    b4 = params["b4"].reshape(1, -1)
    lo = lower.reshape(1, -1).astype(jnp.float32)
    hi = upper.reshape(1, -1).astype(jnp.float32)

    def resident(shape):
        # grid-invariant index_map -> parameter DMA'd once, stays in VMEM
        return pl.BlockSpec(shape, lambda *_: (0,) * len(shape))

    return pl.pallas_call(
        _actor_kernel,
        out_shape=jax.ShapeDtypeStruct((T, B, A), jnp.float32),
        grid=grid,
        in_specs=[
            pl.BlockSpec((t_block, B, S), lambda t: (t, 0, 0)),
            pl.BlockSpec((t_block, B, A), lambda t: (t, 0, 0)),
            resident(w1.shape), resident(b1.shape),
            resident(w2.shape), resident(b2.shape),
            resident(w3.shape), resident(b3.shape),
            resident(w4.shape), resident(b4.shape),
            resident(lo.shape), resident(hi.shape),
        ],
        out_specs=pl.BlockSpec((t_block, B, A), lambda t: (t, 0, 0)),
        compiler_params=pltpu.CompilerParams(
            dimension_semantics=("arbitrary",)),
    )(xs, noise, w1, b1, w2, b2, w3, b3, w4, b4, lo, hi)


def init_actor_params(key, state_dim, action_dim):
    """Deterministic synthetic weights; shapes match the nn.Linear layers but
    stored transposed as (in, out) so the kernel computes x @ W + b."""
    dims = [(state_dim, 128), (128, 64), (64, 32), (32, action_dim)]
    params = {}
    for i, (din, dout) in enumerate(dims, start=1):
        key, kw, kb = jax.random.split(key, 3)
        bound = 1.0 / jnp.sqrt(din)
        params[f"w{i}"] = jax.random.uniform(
            kw, (din, dout), jnp.float32, -bound, bound)
        params[f"b{i}"] = jax.random.uniform(
            kb, (dout,), jnp.float32, -bound, bound)
    return params


def actor_reference(x, params, noise, lower, upper):
    """Pure-JAX f32 reference mirroring the torch module's forward."""
    xn = (x - jnp.mean(x)) / jnp.std(x, ddof=1)
    h = jax.nn.relu(xn @ params["w1"] + params["b1"])
    h = jax.nn.relu(h @ params["w2"] + params["b2"])
    h = jax.nn.relu(h @ params["w3"] + params["b3"])
    a = jax.nn.sigmoid(h @ params["w4"] + params["b4"])
    a = a + noise
    a = lower + a * (upper - lower)
    return jnp.clip(a, lower, upper)


if __name__ == "__main__":
    T, B = 4, 8                       # 4 stacked forward() calls, batch 8 each
    state_dim, action_dim = 32, 4
    noise_std = 0.05
    # lower bound is hard-coded to 0 in the reference forward
    action_space_limits = [(0.0, 1.0), (0.0, 2.0), (0.0, 0.5), (0.0, 3.0)]

    key = jax.random.PRNGKey(0)
    key, kx, kn, kp = jax.random.split(key, 4)

    xs = jax.random.normal(kx, (T, B, state_dim), jnp.float32)
    # torch.normal(mean=0, std=noise_scale, size=x.size()) -- drawn outside the
    # kernel (deterministically) and added inside it.
    noise = noise_std * jax.random.normal(kn, (T, B, action_dim), jnp.float32)
    params = init_actor_params(kp, state_dim, action_dim)

    lower = jnp.zeros((action_dim,), jnp.float32)
    upper = jnp.asarray([hi for (_, hi) in action_space_limits], jnp.float32)

    out = actor_forward_batched(xs, noise, params, lower, upper)
    out = jax.block_until_ready(out)

    ref = jnp.stack([actor_reference(xs[t], params, noise[t], lower, upper)
                     for t in range(T)])

    assert out.shape == (T, B, action_dim)
    assert bool(jnp.all(out >= lower - 1e-6)) and bool(jnp.all(out <= upper + 1e-6))
    max_err = float(jnp.max(jnp.abs(out - ref)))
    # f32 throughout; tolerance stays loose only to absorb default-precision
    # MXU differences between the kernel and the XLA reference.
    assert max_err < 5e-2, f"max abs err vs f32 reference: {max_err}"
    print("KERNEL_OK")
</pallas_src>

<mosaic_0001>
module attributes {stable_mosaic.version = 11 : i64} {
  func.func @_actor_kernel(%arg0: i32, %arg1: memref<4x8x32xf32, #tpu.memory_space<vmem>>, %arg2: memref<4x8x4xf32, #tpu.memory_space<vmem>>, %arg3: memref<32x128xf32, #tpu.memory_space<vmem>>, %arg4: memref<1x128xf32, #tpu.memory_space<vmem>>, %arg5: memref<128x64xf32, #tpu.memory_space<vmem>>, %arg6: memref<1x64xf32, #tpu.memory_space<vmem>>, %arg7: memref<64x32xf32, #tpu.memory_space<vmem>>, %arg8: memref<1x32xf32, #tpu.memory_space<vmem>>, %arg9: memref<32x4xf32, #tpu.memory_space<vmem>>, %arg10: memref<1x4xf32, #tpu.memory_space<vmem>>, %arg11: memref<1x4xf32, #tpu.memory_space<vmem>>, %arg12: memref<1x4xf32, #tpu.memory_space<vmem>>, %arg13: memref<4x8x4xf32, #tpu.memory_space<vmem>>) attributes {dimension_semantics = [#tpu.dimension_semantics<arbitrary>], iteration_bounds = array<i64: 1>, scalar_prefetch = 0 : i64, scratch_operands = 0 : i64, tpu.core_type = #tpu.core_type<tc>, window_params = [{transform_indices = @transform_0, window_bounds = array<i64: 4, 8, 32>}, {transform_indices = @transform_1, window_bounds = array<i64: 4, 8, 4>}, {pipeline_mode = #tpu.pipeline_mode<synchronous>, transform_indices = @transform_2, window_bounds = array<i64: 32, 128>}, {pipeline_mode = #tpu.pipeline_mode<synchronous>, transform_indices = @transform_3, window_bounds = array<i64: 1, 128>}, {pipeline_mode = #tpu.pipeline_mode<synchronous>, transform_indices = @transform_4, window_bounds = array<i64: 128, 64>}, {pipeline_mode = #tpu.pipeline_mode<synchronous>, transform_indices = @transform_5, window_bounds = array<i64: 1, 64>}, {pipeline_mode = #tpu.pipeline_mode<synchronous>, transform_indices = @transform_6, window_bounds = array<i64: 64, 32>}, {pipeline_mode = #tpu.pipeline_mode<synchronous>, transform_indices = @transform_7, window_bounds = array<i64: 1, 32>}, {pipeline_mode = #tpu.pipeline_mode<synchronous>, transform_indices = @transform_8, window_bounds = array<i64: 32, 4>}, {pipeline_mode = #tpu.pipeline_mode<synchronous>, transform_indices = @transform_9, window_bounds = array<i64: 1, 4>}, {pipeline_mode = #tpu.pipeline_mode<synchronous>, transform_indices = @transform_10, window_bounds = array<i64: 1, 4>}, {pipeline_mode = #tpu.pipeline_mode<synchronous>, transform_indices = @transform_11, window_bounds = array<i64: 1, 4>}, {transform_indices = @transform_12, window_bounds = array<i64: 4, 8, 4>}]} {
    %c0 = arith.constant 0 : index
    %c0_0 = arith.constant 0 : index
    %c0_1 = arith.constant 0 : index
    %0 = vector.load %arg1[%c0, %c0_0, %c0_1] : memref<4x8x32xf32, #tpu.memory_space<vmem>>, vector<4x8x32xf32>
    %cst = arith.constant dense<0.000000e+00> : vector<4x8xf32>
    %1 = vector.multi_reduction <add>, %0, %cst [2] : vector<4x8x32xf32> to vector<4x8xf32>
    %2 = vector.shape_cast %1 : vector<4x8xf32> to vector<4x8x1xf32>
    %cst_2 = arith.constant dense<0.000000e+00> : vector<4x1xf32>
    %3 = vector.multi_reduction <add>, %2, %cst_2 [1] : vector<4x8x1xf32> to vector<4x1xf32>
    %4 = vector.shape_cast %3 : vector<4x1xf32> to vector<4x1x1xf32>
    %cst_3 = arith.constant 3.906250e-03 : f32
    %5 = vector.broadcast %cst_3 : f32 to vector<4x1x1xf32>
    %6 = arith.mulf %4, %5 : vector<4x1x1xf32>
    %7 = vector.broadcast %6 : vector<4x1x1xf32> to vector<4x8x32xf32>
    %8 = arith.subf %0, %7 : vector<4x8x32xf32>
    %9 = arith.mulf %8, %8 : vector<4x8x32xf32>
    %cst_4 = arith.constant dense<0.000000e+00> : vector<4x8xf32>
    %10 = vector.multi_reduction <add>, %9, %cst_4 [2] : vector<4x8x32xf32> to vector<4x8xf32>
    %11 = vector.shape_cast %10 : vector<4x8xf32> to vector<4x8x1xf32>
    %cst_5 = arith.constant dense<0.000000e+00> : vector<4x1xf32>
    %12 = vector.multi_reduction <add>, %11, %cst_5 [1] : vector<4x8x1xf32> to vector<4x1xf32>
    %13 = vector.shape_cast %12 : vector<4x1xf32> to vector<4x1x1xf32>
    %cst_6 = arith.constant 0.00392156886 : f32
    %14 = vector.broadcast %cst_6 : f32 to vector<4x1x1xf32>
    %15 = arith.mulf %13, %14 : vector<4x1x1xf32>
    %16 = math.rsqrt %15 : vector<4x1x1xf32>
    %17 = vector.broadcast %16 : vector<4x1x1xf32> to vector<4x8x32xf32>
    %18 = arith.mulf %8, %17 : vector<4x8x32xf32>
    %19 = vector.shape_cast %18 : vector<4x8x32xf32> to vector<32x32xf32>
    %c0_7 = arith.constant 0 : index
    %c0_8 = arith.constant 0 : index
    %20 = vector.load %arg3[%c0_7, %c0_8] : memref<32x128xf32, #tpu.memory_space<vmem>>, vector<32x128xf32>
    %cst_9 = arith.constant dense<0.000000e+00> : vector<32x128xf32>
    %21 = tpu.matmul %19, %20, %cst_9 {dimension_numbers = #tpu.dot_dimension_numbers<[1], [0], [0], [1], [0, 0, 1, 1], [], []>} : vector<32x32xf32>, vector<32x128xf32>, vector<32x128xf32> -> vector<32x128xf32>
    %c0_10 = arith.constant 0 : index
    %c0_11 = arith.constant 0 : index
    %22 = vector.load %arg4[%c0_10, %c0_11] : memref<1x128xf32, #tpu.memory_space<vmem>>, vector<1x128xf32>
    %23 = vector.broadcast %22 : vector<1x128xf32> to vector<32x128xf32>
    %24 = arith.addf %21, %23 : vector<32x128xf32>
    %cst_12 = arith.constant 0.000000e+00 : f32
    %25 = vector.broadcast %cst_12 : f32 to vector<32x128xf32>
    %26 = arith.maximumf %24, %25 : vector<32x128xf32>
    %c0_13 = arith.constant 0 : index
    %c0_14 = arith.constant 0 : index
    %27 = vector.load %arg5[%c0_13, %c0_14] : memref<128x64xf32, #tpu.memory_space<vmem>>, vector<128x64xf32>
    %cst_15 = arith.constant dense<0.000000e+00> : vector<32x64xf32>
    %28 = tpu.matmul %26, %27, %cst_15 {dimension_numbers = #tpu.dot_dimension_numbers<[1], [0], [0], [1], [0, 0, 1, 1], [], []>} : vector<32x128xf32>, vector<128x64xf32>, vector<32x64xf32> -> vector<32x64xf32>
    %c0_16 = arith.constant 0 : index
    %c0_17 = arith.constant 0 : index
    %29 = vector.load %arg6[%c0_16, %c0_17] : memref<1x64xf32, #tpu.memory_space<vmem>>, vector<1x64xf32>
    %30 = vector.broadcast %29 : vector<1x64xf32> to vector<32x64xf32>
    %31 = arith.addf %28, %30 : vector<32x64xf32>
    %cst_18 = arith.constant 0.000000e+00 : f32
    %32 = vector.broadcast %cst_18 : f32 to vector<32x64xf32>
    %33 = arith.maximumf %31, %32 : vector<32x64xf32>
    %c0_19 = arith.constant 0 : index
    %c0_20 = arith.constant 0 : index
    %34 = vector.load %arg7[%c0_19, %c0_20] : memref<64x32xf32, #tpu.memory_space<vmem>>, vector<64x32xf32>
    %cst_21 = arith.constant dense<0.000000e+00> : vector<32x32xf32>
    %35 = tpu.matmul %33, %34, %cst_21 {dimension_numbers = #tpu.dot_dimension_numbers<[1], [0], [0], [1], [0, 0, 1, 1], [], []>} : vector<32x64xf32>, vector<64x32xf32>, vector<32x32xf32> -> vector<32x32xf32>
    %c0_22 = arith.constant 0 : index
    %c0_23 = arith.constant 0 : index
    %36 = vector.load %arg8[%c0_22, %c0_23] : memref<1x32xf32, #tpu.memory_space<vmem>>, vector<1x32xf32>
    %37 = vector.broadcast %36 : vector<1x32xf32> to vector<32x32xf32>
    %38 = arith.addf %35, %37 : vector<32x32xf32>
    %cst_24 = arith.constant 0.000000e+00 : f32
    %39 = vector.broadcast %cst_24 : f32 to vector<32x32xf32>
    %40 = arith.maximumf %38, %39 : vector<32x32xf32>
    %c0_25 = arith.constant 0 : index
    %c0_26 = arith.constant 0 : index
    %41 = vector.load %arg9[%c0_25, %c0_26] : memref<32x4xf32, #tpu.memory_space<vmem>>, vector<32x4xf32>
    %cst_27 = arith.constant dense<0.000000e+00> : vector<32x4xf32>
    %42 = tpu.matmul %40, %41, %cst_27 {dimension_numbers = #tpu.dot_dimension_numbers<[1], [0], [0], [1], [0, 0, 1, 1], [], []>} : vector<32x32xf32>, vector<32x4xf32>, vector<32x4xf32> -> vector<32x4xf32>
    %c0_28 = arith.constant 0 : index
    %c0_29 = arith.constant 0 : index
    %43 = vector.load %arg10[%c0_28, %c0_29] : memref<1x4xf32, #tpu.memory_space<vmem>>, vector<1x4xf32>
    %44 = vector.broadcast %43 : vector<1x4xf32> to vector<32x4xf32>
    %45 = arith.addf %42, %44 : vector<32x4xf32>
    %46 = arith.negf %45 : vector<32x4xf32>
    %47 = math.exp %46 : vector<32x4xf32>
    %cst_30 = arith.constant 1.000000e+00 : f32
    %48 = vector.broadcast %cst_30 : f32 to vector<32x4xf32>
    %49 = arith.addf %48, %47 : vector<32x4xf32>
    %50 = arith.divf %48, %49 : vector<32x4xf32>
    %51 = vector.shape_cast %50 : vector<32x4xf32> to vector<4x8x4xf32>
    %c0_31 = arith.constant 0 : index
    %c0_32 = arith.constant 0 : index
    %c0_33 = arith.constant 0 : index
    %52 = vector.load %arg2[%c0_31, %c0_32, %c0_33] : memref<4x8x4xf32, #tpu.memory_space<vmem>>, vector<4x8x4xf32>
    %53 = arith.addf %51, %52 : vector<4x8x4xf32>
    %c0_34 = arith.constant 0 : index
    %c0_35 = arith.constant 0 : index
    %54 = vector.load %arg11[%c0_34, %c0_35] : memref<1x4xf32, #tpu.memory_space<vmem>>, vector<1x4xf32>
    %c0_36 = arith.constant 0 : index
    %c0_37 = arith.constant 0 : index
    %55 = vector.load %arg12[%c0_36, %c0_37] : memref<1x4xf32, #tpu.memory_space<vmem>>, vector<1x4xf32>
    %56 = arith.subf %55, %54 : vector<1x4xf32>
    %57 = vector.shape_cast %56 : vector<1x4xf32> to vector<1x1x4xf32>
    %58 = vector.broadcast %57 : vector<1x1x4xf32> to vector<4x8x4xf32>
    %59 = arith.mulf %53, %58 : vector<4x8x4xf32>
    %60 = vector.shape_cast %54 : vector<1x4xf32> to vector<1x1x4xf32>
    %61 = vector.broadcast %60 : vector<1x1x4xf32> to vector<4x8x4xf32>
    %62 = arith.addf %61, %59 : vector<4x8x4xf32>
    %63 = vector.shape_cast %54 : vector<1x4xf32> to vector<1x1x4xf32>
    %64 = vector.broadcast %63 : vector<1x1x4xf32> to vector<4x8x4xf32>
    %65 = arith.maximumf %62, %64 : vector<4x8x4xf32>
    %66 = vector.shape_cast %55 : vector<1x4xf32> to vector<1x1x4xf32>
    %67 = vector.broadcast %66 : vector<1x1x4xf32> to vector<4x8x4xf32>
    %68 = arith.minimumf %65, %67 : vector<4x8x4xf32>
    %c0_38 = arith.constant 0 : index
    %c0_39 = arith.constant 0 : index
    %c0_40 = arith.constant 0 : index
    %69 = vector.load %arg13[%c0_38, %c0_39, %c0_40] : memref<4x8x4xf32, #tpu.memory_space<vmem>>, vector<4x8x4xf32>
    tpu.vector_store %arg13[%c0_38, %c0_39, %c0_40], %68 {strides = array<i32>} : memref<4x8x4xf32, #tpu.memory_space<vmem>>, vector<4x8x4xf32>,
    return
  }
  func.func @transform_0(%arg0: i32) -> (i32, i32, i32) {
    %c0_i32 = arith.constant 0 : i32
    %c0_i32_0 = arith.constant 0 : i32
    %c0_i32_1 = arith.constant 0 : i32
    return %arg0, %c0_i32, %c0_i32_0 : i32, i32, i32
  }
  func.func @transform_1(%arg0: i32) -> (i32, i32, i32) {
    %c0_i32 = arith.constant 0 : i32
    %c0_i32_0 = arith.constant 0 : i32
    %c0_i32_1 = arith.constant 0 : i32
    return %arg0, %c0_i32, %c0_i32_0 : i32, i32, i32
  }
  func.func @transform_2(%arg0: i32) -> (i32, i32) {
    %c0_i32 = arith.constant 0 : i32
    %c0_i32_0 = arith.constant 0 : i32
    %c0_i32_1 = arith.constant 0 : i32
    return %c0_i32, %c0_i32_0 : i32, i32
  }
  func.func @transform_3(%arg0: i32) -> (i32, i32) {
    %c0_i32 = arith.constant 0 : i32
    %c0_i32_0 = arith.constant 0 : i32
    %c0_i32_1 = arith.constant 0 : i32
    return %c0_i32, %c0_i32_0 : i32, i32
  }
  func.func @transform_4(%arg0: i32) -> (i32, i32) {
    %c0_i32 = arith.constant 0 : i32
    %c0_i32_0 = arith.constant 0 : i32
    %c0_i32_1 = arith.constant 0 : i32
    return %c0_i32, %c0_i32_0 : i32, i32
  }
  func.func @transform_5(%arg0: i32) -> (i32, i32) {
    %c0_i32 = arith.constant 0 : i32
    %c0_i32_0 = arith.constant 0 : i32
    %c0_i32_1 = arith.constant 0 : i32
    return %c0_i32, %c0_i32_0 : i32, i32
  }
  func.func @transform_6(%arg0: i32) -> (i32, i32) {
    %c0_i32 = arith.constant 0 : i32
    %c0_i32_0 = arith.constant 0 : i32
    %c0_i32_1 = arith.constant 0 : i32
    return %c0_i32, %c0_i32_0 : i32, i32
  }
  func.func @transform_7(%arg0: i32) -> (i32, i32) {
    %c0_i32 = arith.constant 0 : i32
    %c0_i32_0 = arith.constant 0 : i32
    %c0_i32_1 = arith.constant 0 : i32
    return %c0_i32, %c0_i32_0 : i32, i32
  }
  func.func @transform_8(%arg0: i32) -> (i32, i32) {
    %c0_i32 = arith.constant 0 : i32
    %c0_i32_0 = arith.constant 0 : i32
    %c0_i32_1 = arith.constant 0 : i32
    return %c0_i32, %c0_i32_0 : i32, i32
  }
  func.func @transform_9(%arg0: i32) -> (i32, i32) {
    %c0_i32 = arith.constant 0 : i32
    %c0_i32_0 = arith.constant 0 : i32
    %c0_i32_1 = arith.constant 0 : i32
    return %c0_i32, %c0_i32_0 : i32, i32
  }
  func.func @transform_10(%arg0: i32) -> (i32, i32) {
    %c0_i32 = arith.constant 0 : i32
    %c0_i32_0 = arith.constant 0 : i32
    %c0_i32_1 = arith.constant 0 : i32
    return %c0_i32, %c0_i32_0 : i32, i32
  }
  func.func @transform_11(%arg0: i32) -> (i32, i32) {
    %c0_i32 = arith.constant 0 : i32
    %c0_i32_0 = arith.constant 0 : i32
    %c0_i32_1 = arith.constant 0 : i32
    return %c0_i32, %c0_i32_0 : i32, i32
  }
  func.func @transform_12(%arg0: i32) -> (i32, i32, i32) {
    %c0_i32 = arith.constant 0 : i32
    %c0_i32_0 = arith.constant 0 : i32
    %c0_i32_1 = arith.constant 0 : i32
    return %arg0, %c0_i32, %c0_i32_0 : i32, i32, i32
  }
}

</mosaic_0001>

<llo_original>
// kernel: tpu_custom_call.1
$region0: #{tpu_custom_call.1}
  #allocation0 [shape = 'u32[]', space=smem, size = 0x4, offset = 0x4, fixed_abs, tag = 'smem constant byte address 0x4 - core index']
  #allocation1 [shape = 'u32[144,128]{1,0:T(1,128)}', space=vmem, size = 0x12000, scoped, tag = 'internal scratch']
  %s0 = inlined_call_operand.vmem [shape: f32[4,8,32], index: 0, kind: input, shape index: {}]
  %s1 = inlined_call_operand.vmem [shape: f32[4,8,4], index: 1, kind: input, shape index: {}]
  %s2 = inlined_call_operand.vmem [shape: f32[32,128], index: 2, kind: input, shape index: {}]
  %s3 = inlined_call_operand.vmem [shape: f32[1,128], index: 3, kind: input, shape index: {}]
  %s4 = inlined_call_operand.vmem [shape: f32[128,64], index: 4, kind: input, shape index: {}]
  %s5 = inlined_call_operand.vmem [shape: f32[1,64], index: 5, kind: input, shape index: {}]
  %s6 = inlined_call_operand.vmem [shape: f32[64,32], index: 6, kind: input, shape index: {}]
  %s7 = inlined_call_operand.vmem [shape: f32[1,32], index: 7, kind: input, shape index: {}]
  %s8 = inlined_call_operand.vmem [shape: f32[32,4], index: 8, kind: input, shape index: {}]
  %s9 = inlined_call_operand.vmem [shape: f32[1,4], index: 9, kind: input, shape index: {}]
  %s10 = inlined_call_operand.vmem [shape: f32[1,4], index: 10, kind: input, shape index: {}]
  %s11 = inlined_call_operand.vmem [shape: f32[1,4], index: 11, kind: input, shape index: {}]
  %s12 = inlined_call_operand.vmem [shape: f32[4,8,4], index: 12, kind: output, shape index: {}]
  %s13 = sld [smem:[#allocation0]]
  $region58: #{tpu_custom_call.1} parent=0
    _
  %s15 = ssub.s32 1, %s13
  %s16 = scalar_select 0, %s15, %s13
  // Predicated region
  $region2: #{tpu_custom_call.1} parent=0 // pred_check
    _
  $region3: #{tpu_custom_call.1} parent=0 // pred_check_branch
    %18 = sbr.rel (0) target = $region5
  $region4: #{tpu_custom_call.1} parent=0 // pred_region
    _
  $region5: #{tpu_custom_call.1} parent=0 // pred_fallthru
    _
  // Predicated region
  $region6: #{tpu_custom_call.1} parent=0 // pred_check
    _
  $region7: #{tpu_custom_call.1} parent=0 // pred_check_branch
    %20 = sbr.rel (0) target = $region9
  $region8: #{tpu_custom_call.1} parent=0 // pred_region
    _
  $region9: #{tpu_custom_call.1} parent=0 // pred_fallthru
    _
  // Predicated region
  $region10: #{tpu_custom_call.1} parent=0 // pred_check
    _
  $region11: #{tpu_custom_call.1} parent=0 // pred_check_branch
    %22 = sbr.rel (0) target = $region13
  $region12: #{tpu_custom_call.1} parent=0 // pred_region
    _
  $region13: #{tpu_custom_call.1} parent=0 // pred_fallthru
    _
  // Predicated region
  $region14: #{tpu_custom_call.1} parent=0 // pred_check
    _
  $region15: #{tpu_custom_call.1} parent=0 // pred_check_branch
    %24 = sbr.rel (0) target = $region17
  $region16: #{tpu_custom_call.1} parent=0 // pred_region
    _
  $region17: #{tpu_custom_call.1} parent=0 // pred_fallthru
    _
  // Predicated region
  $region18: #{tpu_custom_call.1} parent=0 // pred_check
    _
  $region19: #{tpu_custom_call.1} parent=0 // pred_check_branch
    %26 = sbr.rel (0) target = $region21
  $region20: #{tpu_custom_call.1} parent=0 // pred_region
    _
  $region21: #{tpu_custom_call.1} parent=0 // pred_fallthru
    _
  // Predicated region
  $region22: #{tpu_custom_call.1} parent=0 // pred_check
    _
  $region23: #{tpu_custom_call.1} parent=0 // pred_check_branch
    %28 = sbr.rel (0) target = $region25
  $region24: #{tpu_custom_call.1} parent=0 // pred_region
    _
  $region25: #{tpu_custom_call.1} parent=0 // pred_fallthru
    _
  // Predicated region
  $region26: #{tpu_custom_call.1} parent=0 // pred_check
    _
  $region27: #{tpu_custom_call.1} parent=0 // pred_check_branch
    %30 = sbr.rel (0) target = $region29
  $region28: #{tpu_custom_call.1} parent=0 // pred_region
    _
  $region29: #{tpu_custom_call.1} parent=0 // pred_fallthru
    _
  // Predicated region
  $region30: #{tpu_custom_call.1} parent=0 // pred_check
    _
  $region31: #{tpu_custom_call.1} parent=0 // pred_check_branch
    %32 = sbr.rel (0) target = $region33
  $region32: #{tpu_custom_call.1} parent=0 // pred_region
    _
  $region33: #{tpu_custom_call.1} parent=0 // pred_fallthru
    _
  // Predicated region
  $region34: #{tpu_custom_call.1} parent=0 // pred_check
    _
  $region35: #{tpu_custom_call.1} parent=0 // pred_check_branch
    %34 = sbr.rel (0) target = $region37
  $region36: #{tpu_custom_call.1} parent=0 // pred_region
    _
  $region37: #{tpu_custom_call.1} parent=0 // pred_fallthru
    _
  // Predicated region
  $region38: #{tpu_custom_call.1} parent=0 // pred_check
    _
  $region39: #{tpu_custom_call.1} parent=0 // pred_check_branch
    %36 = sbr.rel (0) target = $region41
  $region40: #{tpu_custom_call.1} parent=0 // pred_region
    _
  $region41: #{tpu_custom_call.1} parent=0 // pred_fallthru
    _
  // Predicated region
  $region42: #{tpu_custom_call.1} parent=0 // pred_check
    _
  $region43: #{tpu_custom_call.1} parent=0 // pred_check_branch
    %38 = sbr.rel (0) target = $region45
  $region44: #{tpu_custom_call.1} parent=0 // pred_region
    _
  $region45: #{tpu_custom_call.1} parent=0 // pred_fallthru
    _
  // Predicated region
  $region46: #{tpu_custom_call.1} parent=0 // pred_check
    _
  $region47: #{tpu_custom_call.1} parent=0 // pred_check_branch
    %40 = sbr.rel (0) target = $region49
  $region48: #{tpu_custom_call.1} parent=0 // pred_region
    _
  $region49: #{tpu_custom_call.1} parent=0 // pred_fallthru
    _
  %v41 = vld [vmem:[%s0] sm:$0xff]
  %v42 = vld [vmem:[%s0 + $0x8] sm:$0xff]
  %v43 = vld [vmem:[%s0 + $0x10] sm:$0xff]
  %v44 = vld [vmem:[%s0 + $0x18] sm:$0xff]
  %vm45 = vcmask 261120
  %v46 = vsel %vm45, %v41, 0.0
  %47 = vadd.xlane.f32.xlu0 %v46
  %v48 = vpop.xlane.xlu0 %47
  %v49 = vsel %vm45, %v42, 0.0
  %50 = vadd.xlane.f32.xlu0 %v49
  %v51 = vpop.xlane.xlu0 %50
  %v52 = vsel %vm45, %v43, 0.0
  %53 = vadd.xlane.f32.xlu0 %v52
  %v54 = vpop.xlane.xlu0 %53
  %v55 = vsel %vm45, %v44, 0.0
  %56 = vadd.xlane.f32.xlu0 %v55
  %v57 = vpop.xlane.xlu0 %56
  %v58 = vrot.slane %v48, 4
  %v59 = vadd.f32 %v48, %v58
  %v60 = vrot.slane %v59, 2
  %v61 = vadd.f32 %v59, %v60
  %v62 = vrot.slane %v61, 1
  %v63 = vadd.f32 %v61, %v62
  %v64 = vrot.slane %v51, 4
  %v65 = vadd.f32 %v51, %v64
  %v66 = vrot.slane %v65, 2
  %v67 = vadd.f32 %v65, %v66
  %v68 = vrot.slane %v67, 1
  %v69 = vadd.f32 %v67, %v68
  %v70 = vrot.slane %v54, 4
  %v71 = vadd.f32 %v54, %v70
  %v72 = vrot.slane %v71, 2
  %v73 = vadd.f32 %v71, %v72
  %v74 = vrot.slane %v73, 1
  %v75 = vadd.f32 %v73, %v74
  %v76 = vrot.slane %v57, 4
  %v77 = vadd.f32 %v57, %v76
  %v78 = vrot.slane %v77, 2
  %v79 = vadd.f32 %v77, %v78
  %v80 = vrot.slane %v79, 1
  %v81 = vadd.f32 %v79, %v80
  %v82 = vmul.f32 %v63, 0.00390625
  %v83 = vmul.f32 %v69, 0.00390625
  %v84 = vmul.f32 %v75, 0.00390625
  %v85 = vmul.f32 %v81, 0.00390625
  %v86 = vsub.f32 %v41, %v82
  %v87 = vsub.f32 %v42, %v83
  %v88 = vsub.f32 %v43, %v84
  %v89 = vsub.f32 %v44, %v85
  %v90 = vmul.f32 %v86, %v86
  %v91 = vmul.f32 %v87, %v87
  %v92 = vmul.f32 %v88, %v88
  %v93 = vmul.f32 %v89, %v89
  %v94 = vsel %vm45, %v90, 0.0
  %95 = vadd.xlane.f32.xlu0 %v94
  %v96 = vpop.xlane.xlu0 %95
  %v97 = vsel %vm45, %v91, 0.0
  %98 = vadd.xlane.f32.xlu0 %v97
  %v99 = vpop.xlane.xlu0 %98
  %v100 = vsel %vm45, %v92, 0.0
  %101 = vadd.xlane.f32.xlu0 %v100
  %v102 = vpop.xlane.xlu0 %101
  %v103 = vsel %vm45, %v93, 0.0
  %104 = vadd.xlane.f32.xlu0 %v103
  %v105 = vpop.xlane.xlu0 %104
  %v106 = vrot.slane %v96, 4
  %v107 = vadd.f32 %v96, %v106
  %v108 = vrot.slane %v107, 2
  %v109 = vadd.f32 %v107, %v108
  %v110 = vrot.slane %v109, 1
  %v111 = vadd.f32 %v109, %v110
  %v112 = vrot.slane %v99, 4
  %v113 = vadd.f32 %v99, %v112
  %v114 = vrot.slane %v113, 2
  %v115 = vadd.f32 %v113, %v114
  %v116 = vrot.slane %v115, 1
  %v117 = vadd.f32 %v115, %v116
  %v118 = vrot.slane %v102, 4
  %v119 = vadd.f32 %v102, %v118
  %v120 = vrot.slane %v119, 2
  %v121 = vadd.f32 %v119, %v120
  %v122 = vrot.slane %v121, 1
  %v123 = vadd.f32 %v121, %v122
  %v124 = vrot.slane %v105, 4
  %v125 = vadd.f32 %v105, %v124
  %v126 = vrot.slane %v125, 2
  %v127 = vadd.f32 %v125, %v126
  %v128 = vrot.slane %v127, 1
  %v129 = vadd.f32 %v127, %v128
  %v130 = vmul.f32 %v111, 0.003921569
  %v131 = vmul.f32 %v117, 0.003921569
  %v132 = vmul.f32 %v123, 0.003921569
  %v133 = vmul.f32 %v129, 0.003921569
  %v134 = vrsqrt.pop %v130
  %v135 = vrsqrt.pop %v131
  %v136 = vrsqrt.pop %v132
  %v137 = vrsqrt.pop %v133
  %v138 = vmul.f32 %v86, %v134
  %v139 = vmul.f32 %v87, %v135
  %v140 = vmul.f32 %v88, %v136
  %v141 = vmul.f32 %v89, %v137
  %v142 = vld [vmem:[%s2] sm:$0xff]
  %v143 = vld [vmem:[%s2 + $0x8] sm:$0xff]
  %v144 = vld [vmem:[%s2 + $0x10] sm:$0xff]
  %v145 = vld [vmem:[%s2 + $0x18] sm:$0xff]
  %v146 = vld [vmem:[%s3] sm:$0x1]
  %v148 = vlaneseq
  %v149 = vshrl.u32 %v148, 7
  %v150 = vsub.s32 0, %v149
  %v151 = vrot.slane %v146, %v150
  %v154 = vsel %vm45, %v138, 0
  %v157 = vsel %vm45, %v139, 0
  %v160 = vsel %vm45, %v140, 0
  %v163 = vsel %vm45, %v141, 0
  %165 = vmatprep.subr.mxu0 0.0
  %166 = vmatpush1.msra.mxu0 %v142
  %167 = vmatprep.subr.mxu0 0.0
  %168 = vmatpush1.msra.mxu0 %v143
  %169 = vmatprep.subr.mxu0 0.0
  %170 = vmatpush1.msra.mxu0 %v144
  %171 = vmatprep.subr.mxu0 0.0
  %172 = vmatpush1.msra.mxu0 %v145
  %173 = vmatprep.subr.mxu0 0.0
  %174 = vmatpush1.msra.mxu0 0.0
  %175 = vmatprep.subr.mxu0 0.0
  %176 = vmatpush1.msra.mxu0 0.0
  %177 = vmatprep.subr.mxu0 0.0
  %178 = vmatpush1.msra.mxu0 0.0
  %179 = vmatprep.subr.mxu0 0.0
  %180 = vmatpush1.msra.mxu0 0.0
  %181 = vmatprep.subr.mxu0 0.0
  %182 = vmatpush1.msra.mxu0 0.0
  %183 = vmatprep.subr.mxu0 0.0
  %184 = vmatpush1.msra.mxu0 0.0
  %185 = vmatprep.subr.mxu0 0.0
  %186 = vmatpush1.msra.mxu0 0.0
  %187 = vmatprep.subr.mxu0 0.0
  %188 = vmatpush1.msra.mxu0 0.0
  %189 = vmatprep.subr.mxu0 0.0
  %190 = vmatpush1.msra.mxu0 0.0
  %191 = vmatprep.subr.mxu0 0.0
  %192 = vmatpush1.msra.mxu0 0.0
  %193 = vmatprep.subr.mxu0 0.0
  %194 = vmatpush1.msra.mxu0 0.0
  %195 = vmatprep.subr.mxu0 0.0
  %196 = vmatpush1.msra.mxu0 0.0
  %197 = vmatprep.subr.mxu0 0.0
  %198 = vmatpush1.msra.mxu0 0.0
  %199 = vmatprep.subr.mxu0 0.0
  %200 = vmatpush1.msra.mxu0 0.0
  %201 = vmatprep.subr.mxu0 0.0
  %202 = vmatpush1.msra.mxu0 0.0
  %203 = vmatprep.subr.mxu0 0.0
  %204 = vmatpush1.msra.mxu0 0.0
  %205 = vmatprep.subr.mxu0 0.0
  %206 = vmatpush1.msra.mxu0 0.0
  %207 = vmatprep.subr.mxu0 0.0
  %208 = vmatpush1.msra.mxu0 0.0
  %209 = vmatprep.subr.mxu0 0.0
  %210 = vmatpush1.msra.mxu0 0.0
  %211 = vmatprep.subr.mxu0 0.0
  %212 = vmatpush1.msra.mxu0 0.0
  %213 = vmatprep.subr.mxu0 0.0
  %214 = vmatpush1.msra.mxu0 0.0
  %215 = vmatprep.subr.mxu0 0.0
  %216 = vmatpush1.msra.mxu0 0.0
  %217 = vmatprep.subr.mxu0 0.0
  %218 = vmatpush1.msra.mxu0 0.0
  %219 = vmatprep.subr.mxu0 0.0
  %220 = vmatpush1.msra.mxu0 0.0
  %221 = vmatprep.subr.mxu0 0.0
  %222 = vmatpush1.msra.mxu0 0.0
  %223 = vmatprep.subr.mxu0 0.0
  %224 = vmatpush1.msra.mxu0 0.0
  %225 = vmatprep.subr.mxu0 0.0
  %226 = vmatpush1.msra.mxu0 0.0
  %227 = vmatprep.subr.mxu0 0.0
  %228 = vmatpush1.msra.mxu0 0.0
  %229 = vmatprep.mubr.f32.mxu0 0.0
  %230 = vmatmul.mubr.f32.gmra.mrb[0].mxu0 %v154
  %v231 = vpop.f32.mrb[0].mxu0
  %v232 = vadd.f32 %v151, %v231
  %v233 = vpop.f32.mrb[0].mxu0
  %234 = vmatprep.mubr.f32.mxu0 0.0
  %235 = vmatmul.mubr.f32.gmra.mrb[0].mxu0 %v157
  %v236 = vpop.f32.mrb[0].mxu0
  %v237 = vadd.f32 %v151, %v236
  %v238 = vpop.f32.mrb[0].mxu0
  %239 = vmatprep.mubr.f32.mxu0 0.0
  %240 = vmatmul.mubr.f32.gmra.mrb[0].mxu0 %v160
  %v241 = vpop.f32.mrb[0].mxu0
  %v242 = vadd.f32 %v151, %v241
  %v243 = vpop.f32.mrb[0].mxu0
  %244 = vmatprep.mubr.f32.mxu0 0.0
  %245 = vmatmul.mubr.f32.gmra.mrb[0].mxu0 %v163
  %v246 = vpop.f32.mrb[0].mxu0
  %v247 = vadd.f32 %v151, %v246
  %v248 = vpop.f32.mrb[0].mxu0
  %249 = vdwg.mxu0
  %v250 = vmax.f32 %v232, 0.0
  %v251 = vmax.f32 %v237, 0.0
  %v252 = vmax.f32 %v242, 0.0
  %v253 = vmax.f32 %v247, 0.0
  %v254 = vld [vmem:[%s4] sm:$0xff]
  %v255 = vld [vmem:[%s4 + $0x8] sm:$0xff]
  %v256 = vld [vmem:[%s4 + $0x10] sm:$0xff]
  %v257 = vld [vmem:[%s4 + $0x18] sm:$0xff]
  %v258 = vld [vmem:[%s4 + $0x20] sm:$0xff]
  %v259 = vld [vmem:[%s4 + $0x28] sm:$0xff]
  %v260 = vld [vmem:[%s4 + $0x30] sm:$0xff]
  %v261 = vld [vmem:[%s4 + $0x38] sm:$0xff]
  %v262 = vld [vmem:[%s4 + $0x40] sm:$0xff]
  %v263 = vld [vmem:[%s4 + $0x48] sm:$0xff]
  %v264 = vld [vmem:[%s4 + $0x50] sm:$0xff]
  %v265 = vld [vmem:[%s4 + $0x58] sm:$0xff]
  %v266 = vld [vmem:[%s4 + $0x60] sm:$0xff]
  %v267 = vld [vmem:[%s4 + $0x68] sm:$0xff]
  %v268 = vld [vmem:[%s4 + $0x70] sm:$0xff]
  %v269 = vld [vmem:[%s4 + $0x78] sm:$0xff]
  %v270 = vld [vmem:[%s5] sm:$0x1]
  %v272 = vlaneseq
  %v273 = vshrl.u32 %v272, 7
  %v274 = vsub.s32 0, %v273
  %v275 = vrot.slane %v270, %v274
  %277 = vmatprep.subr.mxu0 0.0
  %278 = vmatpush1.msra.mxu0 %v254
  %279 = vmatprep.subr.mxu0 0.0
  %280 = vmatpush1.msra.mxu0 %v255
  %281 = vmatprep.subr.mxu0 0.0
  %282 = vmatpush1.msra.mxu0 %v256
  %283 = vmatprep.subr.mxu0 0.0
  %284 = vmatpush1.msra.mxu0 %v257
  %285 = vmatprep.subr.mxu0 0.0
  %286 = vmatpush1.msra.mxu0 %v258
  %287 = vmatprep.subr.mxu0 0.0
  %288 = vmatpush1.msra.mxu0 %v259
  %289 = vmatprep.subr.mxu0 0.0
  %290 = vmatpush1.msra.mxu0 %v260
  %291 = vmatprep.subr.mxu0 0.0
  %292 = vmatpush1.msra.mxu0 %v261
  %293 = vmatprep.subr.mxu0 0.0
  %294 = vmatpush1.msra.mxu0 %v262
  %295 = vmatprep.subr.mxu0 0.0
  %296 = vmatpush1.msra.mxu0 %v263
  %297 = vmatprep.subr.mxu0 0.0
  %298 = vmatpush1.msra.mxu0 %v264
  %299 = vmatprep.subr.mxu0 0.0
  %300 = vmatpush1.msra.mxu0 %v265
  %301 = vmatprep.subr.mxu0 0.0
  %302 = vmatpush1.msra.mxu0 %v266
  %303 = vmatprep.subr.mxu0 0.0
  %304 = vmatpush1.msra.mxu0 %v267
  %305 = vmatprep.subr.mxu0 0.0
  %306 = vmatpush1.msra.mxu0 %v268
  %307 = vmatprep.subr.mxu0 0.0
  %308 = vmatpush1.msra.mxu0 %v269
  %309 = vmatprep.subr.mxu0 0.0
  %310 = vmatpush1.msra.mxu0 0.0
  %311 = vmatprep.subr.mxu0 0.0
  %312 = vmatpush1.msra.mxu0 0.0
  %313 = vmatprep.subr.mxu0 0.0
  %314 = vmatpush1.msra.mxu0 0.0
  %315 = vmatprep.subr.mxu0 0.0
  %316 = vmatpush1.msra.mxu0 0.0
  %317 = vmatprep.subr.mxu0 0.0
  %318 = vmatpush1.msra.mxu0 0.0
  %319 = vmatprep.subr.mxu0 0.0
  %320 = vmatpush1.msra.mxu0 0.0
  %321 = vmatprep.subr.mxu0 0.0
  %322 = vmatpush1.msra.mxu0 0.0
  %323 = vmatprep.subr.mxu0 0.0
  %324 = vmatpush1.msra.mxu0 0.0
  %325 = vmatprep.subr.mxu0 0.0
  %326 = vmatpush1.msra.mxu0 0.0
  %327 = vmatprep.subr.mxu0 0.0
  %328 = vmatpush1.msra.mxu0 0.0
  %329 = vmatprep.subr.mxu0 0.0
  %330 = vmatpush1.msra.mxu0 0.0
  %331 = vmatprep.subr.mxu0 0.0
  %332 = vmatpush1.msra.mxu0 0.0
  %333 = vmatprep.subr.mxu0 0.0
  %334 = vmatpush1.msra.mxu0 0.0
  %335 = vmatprep.subr.mxu0 0.0
  %336 = vmatpush1.msra.mxu0 0.0
  %337 = vmatprep.subr.mxu0 0.0
  %338 = vmatpush1.msra.mxu0 0.0
  %339 = vmatprep.subr.mxu0 0.0
  %340 = vmatpush1.msra.mxu0 0.0
  %341 = vmatprep.mubr.f32.mxu0 0.0
  %342 = vmatmul.mubr.f32.gmra.mrb[0].mxu0 %v250
  %v343 = vpop.f32.mrb[0].mxu0
  %v344 = vadd.f32 %v275, %v343
  %v345 = vpop.f32.mrb[0].mxu0
  %346 = vmatprep.mubr.f32.mxu0 0.0
  %347 = vmatmul.mubr.f32.gmra.mrb[0].mxu0 %v251
  %v348 = vpop.f32.mrb[0].mxu0
  %v349 = vadd.f32 %v275, %v348
  %v350 = vpop.f32.mrb[0].mxu0
  %351 = vmatprep.mubr.f32.mxu0 0.0
  %352 = vmatmul.mubr.f32.gmra.mrb[0].mxu0 %v252
  %v353 = vpop.f32.mrb[0].mxu0
  %v354 = vadd.f32 %v275, %v353
  %v355 = vpop.f32.mrb[0].mxu0
  %356 = vmatprep.mubr.f32.mxu0 0.0
  %357 = vmatmul.mubr.f32.gmra.mrb[0].mxu0 %v253
  %v358 = vpop.f32.mrb[0].mxu0
  %v359 = vadd.f32 %v275, %v358
  %v360 = vpop.f32.mrb[0].mxu0
  %361 = vdwg.mxu0
  %v362 = vmax.f32 %v344, 0.0
  %v363 = vmax.f32 %v349, 0.0
  %v364 = vmax.f32 %v354, 0.0
  %v365 = vmax.f32 %v359, 0.0
  %v366 = vld [vmem:[%s6] sm:$0xff]
  %v367 = vld [vmem:[%s6 + $0x8] sm:$0xff]
  %v368 = vld [vmem:[%s6 + $0x10] sm:$0xff]
  %v369 = vld [vmem:[%s6 + $0x18] sm:$0xff]
  %v370 = vld [vmem:[%s6 + $0x20] sm:$0xff]
  %v371 = vld [vmem:[%s6 + $0x28] sm:$0xff]
  %v372 = vld [vmem:[%s6 + $0x30] sm:$0xff]
  %v373 = vld [vmem:[%s6 + $0x38] sm:$0xff]
  %v374 = vld [vmem:[%s7] sm:$0x1]
  %v376 = vlaneseq
  %v377 = vshrl.u32 %v376, 7
  %v378 = vsub.s32 0, %v377
  %v379 = vrot.slane %v374, %v378
  %vm381 = vcmask 523264
  %v383 = vsel %vm381, %v362, 0
  %v386 = vsel %vm381, %v363, 0
  %v389 = vsel %vm381, %v364, 0
  %v392 = vsel %vm381, %v365, 0
  %394 = vmatprep.subr.mxu0 0.0
  %395 = vmatpush1.msra.mxu0 %v366
  %396 = vmatprep.subr.mxu0 0.0
  %397 = vmatpush1.msra.mxu0 %v367
  %398 = vmatprep.subr.mxu0 0.0
  %399 = vmatpush1.msra.mxu0 %v368
  %400 = vmatprep.subr.mxu0 0.0
  %401 = vmatpush1.msra.mxu0 %v369
  %402 = vmatprep.subr.mxu0 0.0
  %403 = vmatpush1.msra.mxu0 %v370
  %404 = vmatprep.subr.mxu0 0.0
  %405 = vmatpush1.msra.mxu0 %v371
  %406 = vmatprep.subr.mxu0 0.0
  %407 = vmatpush1.msra.mxu0 %v372
  %408 = vmatprep.subr.mxu0 0.0
  %409 = vmatpush1.msra.mxu0 %v373
  %410 = vmatprep.subr.mxu0 0.0
  %411 = vmatpush1.msra.mxu0 0.0
  %412 = vmatprep.subr.mxu0 0.0
  %413 = vmatpush1.msra.mxu0 0.0
  %414 = vmatprep.subr.mxu0 0.0
  %415 = vmatpush1.msra.mxu0 0.0
  %416 = vmatprep.subr.mxu0 0.0
  %417 = vmatpush1.msra.mxu0 0.0
  %418 = vmatprep.subr.mxu0 0.0
  %419 = vmatpush1.msra.mxu0 0.0
  %420 = vmatprep.subr.mxu0 0.0
  %421 = vmatpush1.msra.mxu0 0.0
  %422 = vmatprep.subr.mxu0 0.0
  %423 = vmatpush1.msra.mxu0 0.0
  %424 = vmatprep.subr.mxu0 0.0
  %425 = vmatpush1.msra.mxu0 0.0
  %426 = vmatprep.subr.mxu0 0.0
  %427 = vmatpush1.msra.mxu0 0.0
  %428 = vmatprep.subr.mxu0 0.0
  %429 = vmatpush1.msra.mxu0 0.0
  %430 = vmatprep.subr.mxu0 0.0
  %431 = vmatpush1.msra.mxu0 0.0
  %432 = vmatprep.subr.mxu0 0.0
  %433 = vmatpush1.msra.mxu0 0.0
  %434 = vmatprep.subr.mxu0 0.0
  %435 = vmatpush1.msra.mxu0 0.0
  %436 = vmatprep.subr.mxu0 0.0
  %437 = vmatpush1.msra.mxu0 0.0
  %438 = vmatprep.subr.mxu0 0.0
  %439 = vmatpush1.msra.mxu0 0.0
  %440 = vmatprep.subr.mxu0 0.0
  %441 = vmatpush1.msra.mxu0 0.0
  %442 = vmatprep.subr.mxu0 0.0
  %443 = vmatpush1.msra.mxu0 0.0
  %444 = vmatprep.subr.mxu0 0.0
  %445 = vmatpush1.msra.mxu0 0.0
  %446 = vmatprep.subr.mxu0 0.0
  %447 = vmatpush1.msra.mxu0 0.0
  %448 = vmatprep.subr.mxu0 0.0
  %449 = vmatpush1.msra.mxu0 0.0
  %450 = vmatprep.subr.mxu0 0.0
  %451 = vmatpush1.msra.mxu0 0.0
  %452 = vmatprep.subr.mxu0 0.0
  %453 = vmatpush1.msra.mxu0 0.0
  %454 = vmatprep.subr.mxu0 0.0
  %455 = vmatpush1.msra.mxu0 0.0
  %456 = vmatprep.subr.mxu0 0.0
  %457 = vmatpush1.msra.mxu0 0.0
  %458 = vmatprep.mubr.f32.mxu0 0.0
  %459 = vmatmul.mubr.f32.gmra.mrb[0].mxu0 %v383
  %v460 = vpop.f32.mrb[0].mxu0
  %v461 = vadd.f32 %v379, %v460
  %v462 = vpop.f32.mrb[0].mxu0
  %463 = vmatprep.mubr.f32.mxu0 0.0
  %464 = vmatmul.mubr.f32.gmra.mrb[0].mxu0 %v386
  %v465 = vpop.f32.mrb[0].mxu0
  %v466 = vadd.f32 %v379, %v465
  %v467 = vpop.f32.mrb[0].mxu0
  %468 = vmatprep.mubr.f32.mxu0 0.0
  %469 = vmatmul.mubr.f32.gmra.mrb[0].mxu0 %v389
  %v470 = vpop.f32.mrb[0].mxu0
  %v471 = vadd.f32 %v379, %v470
  %v472 = vpop.f32.mrb[0].mxu0
  %473 = vmatprep.mubr.f32.mxu0 0.0
  %474 = vmatmul.mubr.f32.gmra.mrb[0].mxu0 %v392
  %v475 = vpop.f32.mrb[0].mxu0
  %v476 = vadd.f32 %v379, %v475
  %v477 = vpop.f32.mrb[0].mxu0
  %478 = vdwg.mxu0
  %v479 = vmax.f32 %v461, 0.0
  %v480 = vmax.f32 %v466, 0.0
  %v481 = vmax.f32 %v471, 0.0
  %v482 = vmax.f32 %v476, 0.0
  %v483 = vld [vmem:[%s8] sm:$0xff]
  %v484 = vld [vmem:[%s8 + $0x8] sm:$0xff]
  %v485 = vld [vmem:[%s8 + $0x10] sm:$0xff]
  %v486 = vld [vmem:[%s8 + $0x18] sm:$0xff]
  %v487 = vld [vmem:[%s9] sm:$0x1]
  %v489 = vlaneseq
  %v490 = vshrl.u32 %v489, 7
  %v491 = vsub.s32 0, %v490
  %v492 = vrot.slane %v487, %v491
  %v495 = vsel %vm45, %v479, 0
  %v498 = vsel %vm45, %v480, 0
  %v501 = vsel %vm45, %v481, 0
  %v504 = vsel %vm45, %v482, 0
  %506 = vmatprep.subr.mxu0 0.0
  %507 = vmatpush1.msra.mxu0 %v483
  %508 = vmatprep.subr.mxu0 0.0
  %509 = vmatpush1.msra.mxu0 %v484
  %510 = vmatprep.subr.mxu0 0.0
  %511 = vmatpush1.msra.mxu0 %v485
  %512 = vmatprep.subr.mxu0 0.0
  %513 = vmatpush1.msra.mxu0 %v486
  %514 = vmatprep.subr.mxu0 0.0
  %515 = vmatpush1.msra.mxu0 0.0
  %516 = vmatprep.subr.mxu0 0.0
  %517 = vmatpush1.msra.mxu0 0.0
  %518 = vmatprep.subr.mxu0 0.0
  %519 = vmatpush1.msra.mxu0 0.0
  %520 = vmatprep.subr.mxu0 0.0
  %521 = vmatpush1.msra.mxu0 0.0
  %522 = vmatprep.subr.mxu0 0.0
  %523 = vmatpush1.msra.mxu0 0.0
  %524 = vmatprep.subr.mxu0 0.0
  %525 = vmatpush1.msra.mxu0 0.0
  %526 = vmatprep.subr.mxu0 0.0
  %527 = vmatpush1.msra.mxu0 0.0
  %528 = vmatprep.subr.mxu0 0.0
  %529 = vmatpush1.msra.mxu0 0.0
  %530 = vmatprep.subr.mxu0 0.0
  %531 = vmatpush1.msra.mxu0 0.0
  %532 = vmatprep.subr.mxu0 0.0
  %533 = vmatpush1.msra.mxu0 0.0
  %534 = vmatprep.subr.mxu0 0.0
  %535 = vmatpush1.msra.mxu0 0.0
  %536 = vmatprep.subr.mxu0 0.0
  %537 = vmatpush1.msra.mxu0 0.0
  %538 = vmatprep.subr.mxu0 0.0
  %539 = vmatpush1.msra.mxu0 0.0
  %540 = vmatprep.subr.mxu0 0.0
  %541 = vmatpush1.msra.mxu0 0.0
  %542 = vmatprep.subr.mxu0 0.0
  %543 = vmatpush1.msra.mxu0 0.0
  %544 = vmatprep.subr.mxu0 0.0
  %545 = vmatpush1.msra.mxu0 0.0
  %546 = vmatprep.subr.mxu0 0.0
  %547 = vmatpush1.msra.mxu0 0.0
  %548 = vmatprep.subr.mxu0 0.0
  %549 = vmatpush1.msra.mxu0 0.0
  %550 = vmatprep.subr.mxu0 0.0
  %551 = vmatpush1.msra.mxu0 0.0
  %552 = vmatprep.subr.mxu0 0.0
  %553 = vmatpush1.msra.mxu0 0.0
  %554 = vmatprep.subr.mxu0 0.0
  %555 = vmatpush1.msra.mxu0 0.0
  %556 = vmatprep.subr.mxu0 0.0
  %557 = vmatpush1.msra.mxu0 0.0
  %558 = vmatprep.subr.mxu0 0.0
  %559 = vmatpush1.msra.mxu0 0.0
  %560 = vmatprep.subr.mxu0 0.0
  %561 = vmatpush1.msra.mxu0 0.0
  %562 = vmatprep.subr.mxu0 0.0
  %563 = vmatpush1.msra.mxu0 0.0
  %564 = vmatprep.subr.mxu0 0.0
  %565 = vmatpush1.msra.mxu0 0.0
  %566 = vmatprep.subr.mxu0 0.0
  %567 = vmatpush1.msra.mxu0 0.0
  %568 = vmatprep.subr.mxu0 0.0
  %569 = vmatpush1.msra.mxu0 0.0
  %570 = vmatprep.mubr.f32.mxu0 0.0
  %571 = vmatmul.mubr.f32.gmra.mrb[0].mxu0 %v495
  %v572 = vpop.f32.mrb[0].mxu0
  %v573 = vadd.f32 %v492, %v572
  %v574 = vpop.f32.mrb[0].mxu0
  %575 = vmatprep.mubr.f32.mxu0 0.0
  %576 = vmatmul.mubr.f32.gmra.mrb[0].mxu0 %v498
  %v577 = vpop.f32.mrb[0].mxu0
  %v578 = vadd.f32 %v492, %v577
  %v579 = vpop.f32.mrb[0].mxu0
  %580 = vmatprep.mubr.f32.mxu0 0.0
  %581 = vmatmul.mubr.f32.gmra.mrb[0].mxu0 %v501
  %v582 = vpop.f32.mrb[0].mxu0
  %v583 = vadd.f32 %v492, %v582
  %v584 = vpop.f32.mrb[0].mxu0
  %585 = vmatprep.mubr.f32.mxu0 0.0
  %586 = vmatmul.mubr.f32.gmra.mrb[0].mxu0 %v504
  %v587 = vpop.f32.mrb[0].mxu0
  %v588 = vadd.f32 %v492, %v587
  %v589 = vpop.f32.mrb[0].mxu0
  %590 = vdwg.mxu0
  %v591 = vxor.u32 %v573, 2147483648
  %v592 = vxor.u32 %v578, 2147483648
  %v593 = vxor.u32 %v583, 2147483648
  %v594 = vxor.u32 %v588, 2147483648
  %v595 = vmul.f32 %v591, 1.442695
  %v596 = vpow.pop %v595
  %v597 = vmul.f32 %v592, 1.442695
  %v598 = vpow.pop %v597
  %v599 = vmul.f32 %v593, 1.442695
  %v600 = vpow.pop %v599
  %v601 = vmul.f32 %v594, 1.442695
  %v602 = vpow.pop %v601
  %v603 = vadd.f32 %v596, 1.0
  %v604 = vadd.f32 %v598, 1.0
  %v605 = vadd.f32 %v600, 1.0
  %v606 = vadd.f32 %v602, 1.0
  %v607 = vrcp.pop %v603
  %v608 = vmul.f32 1.0, %v607
  %v609 = vrcp.pop %v604
  %v610 = vmul.f32 1.0, %v609
  %v611 = vrcp.pop %v605
  %v612 = vmul.f32 1.0, %v611
  %v613 = vrcp.pop %v606
  %v614 = vmul.f32 1.0, %v613
  %v615 = vld [vmem:[%s1] sm:$0xff]
  %v616 = vld [vmem:[%s1 + $0x8] sm:$0xff]
  %v617 = vld [vmem:[%s1 + $0x10] sm:$0xff]
  %v618 = vld [vmem:[%s1 + $0x18] sm:$0xff]
  %v619 = vadd.f32 %v608, %v615
  %v620 = vadd.f32 %v610, %v616
  %v621 = vadd.f32 %v612, %v617
  %v622 = vadd.f32 %v614, %v618
  %v623 = vld [vmem:[%s10] sm:$0x1]
  %v624 = vld [vmem:[%s11] sm:$0x1]
  %v625 = vsub.f32 %v624, %v623
  %v627 = vlaneseq
  %v628 = vshrl.u32 %v627, 7
  %v629 = vsub.s32 0, %v628
  %v630 = vrot.slane %v625, %v629
  %v632 = vmul.f32 %v619, %v630
  %v633 = vmul.f32 %v620, %v630
  %v634 = vmul.f32 %v621, %v630
  %v635 = vmul.f32 %v622, %v630
  %v637 = vlaneseq
  %v638 = vshrl.u32 %v637, 7
  %v639 = vsub.s32 0, %v638
  %v640 = vrot.slane %v623, %v639
  %v642 = vadd.f32 %v640, %v632
  %v643 = vadd.f32 %v640, %v633
  %v644 = vadd.f32 %v640, %v634
  %v645 = vadd.f32 %v640, %v635
  %v646 = vmax.f32 %v642, %v640
  %v647 = vmax.f32 %v643, %v640
  %v648 = vmax.f32 %v644, %v640
  %v649 = vmax.f32 %v645, %v640
  %v651 = vlaneseq
  %v652 = vshrl.u32 %v651, 7
  %v653 = vsub.s32 0, %v652
  %v654 = vrot.slane %v624, %v653
  %v656 = vmin.f32 %v646, %v654
  %v657 = vmin.f32 %v647, %v654
  %v658 = vmin.f32 %v648, %v654
  %v659 = vmin.f32 %v649, %v654
  %vm660 = vcmask 31744
  %661 = vst.msk [vmem:[%s12] sm:$0xff] %vm660, %v656
  %662 = vst.msk [vmem:[%s12 + $0x8] sm:$0xff] %vm660, %v657
  %663 = vst.msk [vmem:[%s12 + $0x10] sm:$0xff] %vm660, %v658
  %664 = vst.msk [vmem:[%s12 + $0x18] sm:$0xff] %vm660, %v659
  // Predicated region
  $region50: #{tpu_custom_call.1} parent=0 // pred_check
    _
  $region51: #{tpu_custom_call.1} parent=0 // pred_check_branch
    %666 = sbr.rel (0) target = $region53
  $region52: #{tpu_custom_call.1} parent=0 // pred_region
    _
  $region53: #{tpu_custom_call.1} parent=0 // pred_fallthru
    _
  // Predicated region
  $region54: #{tpu_custom_call.1} parent=0 // pred_check
    _
  $region55: #{tpu_custom_call.1} parent=0 // pred_check_branch
    %668 = sbr.rel (0) target = $region57
  $region56: #{tpu_custom_call.1} parent=0 // pred_region
    _
  $region57: #{tpu_custom_call.1} parent=0 // pred_fallthru
    _

</llo_original>
